<compile_context>
chip_gen: v7x
topology: tpu7x:2x2x1
jax: 0.10.0
libtpu: 0.0.40
codegen_flags: <defaults>
</compile_context>

<pallas_src>
import functools

import jax
import jax.numpy as jnp
from jax import lax
from jax.experimental import pallas as pl
from jax.experimental.pallas import tpu as pltpu


def _round_up(a, b):
    return ((a + b - 1) // b) * b


# ----------------------------- Pallas kernel ------------------------------ #
def _conv_gemm_kernel(w_ref, p_ref, b_ref, o_ref):
    # w_ref: (C_out, K)  bf16  -- constant index_map => stays VMEM-resident
    # p_ref: (K, tm)     bf16  -- lane-dense loads (tm on lanes)
    # b_ref: (C_out, 1)  f32
    # o_ref: (C_out, tm) f32   -- lane-dense, unmasked stores
    acc = jnp.dot(w_ref[...], p_ref[...], preferred_element_type=jnp.float32)
    o_ref[...] = (acc + b_ref[...]).astype(o_ref.dtype)


def _conv_gemm(wT, patchesT, bias_col, *, tm_max=4096):
    """wT: (C_out, K), patchesT: (K, M), bias_col: (C_out, 1) f32.

    Returns (C_out, M) f32 = wT @ patchesT + bias.
    """
    C_out, K = wT.shape
    _, M = patchesT.shape

    # Biggest lane tile that is a multiple of 128 and not (much) larger than M.
    # VMEM budget (double buffered): 2*tm*(K*2B + C_out*4B) + weights/bias,
    # tiny even at tm=4096 -> safe on v7x's 64 MiB physical VMEM.
    tm = max(128, min(tm_max, _round_up(M, 128)))
    grid_m = pl.cdiv(M, tm)  # ragged last block: loads clamped, stores masked

    in_bytes = (wT.size * wT.dtype.itemsize
                + patchesT.size * patchesT.dtype.itemsize
                + bias_col.size * bias_col.dtype.itemsize)
    out_bytes = C_out * M * 4
    cost = pl.CostEstimate(flops=2 * M * K * C_out,
                           transcendentals=0,
                           bytes_accessed=int(in_bytes + out_bytes))

    return pl.pallas_call(
        _conv_gemm_kernel,
        out_shape=jax.ShapeDtypeStruct((C_out, M), jnp.float32),
        grid_spec=pltpu.PrefetchScalarGridSpec(
            num_scalar_prefetch=0,
            grid=(grid_m,),
            in_specs=[
                pl.BlockSpec((C_out, K), lambda i: (0, 0)),   # weights resident
                pl.BlockSpec((K, tm), lambda i: (0, i)),      # lane-dense loads
                pl.BlockSpec((C_out, 1), lambda i: (0, 0)),   # bias resident
            ],
            out_specs=pl.BlockSpec((C_out, tm), lambda i: (0, i)),
        ),
        compiler_params=pltpu.CompilerParams(
            dimension_semantics=("parallel",)),  # shards across v7x's 2 TCs
        cost_estimate=cost,
    )(wT, patchesT, bias_col)


# ------------------------------ TConv2D glue ------------------------------ #
def tconv2d_forward(x, weight, bias, *, stride=2, padding=1,
                    gemm_dtype=jnp.bfloat16, tm_max=4096):
    """x: (B, C, H, W, T); weight: (C_out, C_in, KH, KW); bias: (C_out,)."""
    B, C, H, W, T = x.shape
    C_out, C_in, KH, KW = weight.shape
    assert C == C_in

    H_out = (H + 2 * padding - KH) // stride + 1
    W_out = (W + 2 * padding - KW) // stride + 1
    K = C_in * KH * KW
    M = B * H_out * W_out * T

    # Channel-leading layout: only a leading-dim swap -> fuses into the patch
    # build (no standalone HBM relayout pass over the big tensor).
    xc = jnp.transpose(x, (1, 0, 2, 3, 4))                       # (C, B, H, W, T)
    xp = jnp.pad(xc, ((0, 0), (0, 0), (padding, padding),
                      (padding, padding), (0, 0)))

    # Build patches^T directly in the (K, M) layout the kernel wants, already
    # cast to the GEMM dtype: one fused materialization, no extra transpose
    # or pad passes.  K ordering = (c, kh, kw), identical to
    # weight.reshape(C_out, C*KH*KW); M ordering = (b, ho, wo, t).
    taps = []
    for kh in range(KH):
        for kw in range(KW):
            taps.append(lax.slice(
                xp,
                (0, 0, kh, kw, 0),
                (C, B, kh + stride * (H_out - 1) + 1,
                 kw + stride * (W_out - 1) + 1, T),
                (1, 1, stride, stride, 1)))                      # (C, B, Ho, Wo, T)
    patchesT = jnp.stack(taps, axis=1)                           # (C, KH*KW, B, Ho, Wo, T)
    patchesT = patchesT.reshape(K, M).astype(gemm_dtype)         # (K, M)

    wT = weight.reshape(C_out, K).astype(gemm_dtype)             # (C_out, K)
    bias_col = bias.reshape(C_out, 1).astype(jnp.float32)

    out = _conv_gemm(wT, patchesT, bias_col, tm_max=tm_max)      # (C_out, M) f32

    # (C_out, B, Ho, Wo, T) -> (B, C_out, Ho, Wo, T): leading-dim swap only.
    out = out.reshape(C_out, B, H_out, W_out, T)
    return jnp.transpose(out, (1, 0, 2, 3, 4))


# ------------------------------- reference -------------------------------- #
def tconv2d_reference(x, weight, bias, *, stride=2, padding=1,
                      cast_dtype=jnp.float32):
    """Pure-JAX reference; cast_dtype lets us match the kernel's bf16 rounding."""
    B, C, H, W, T = x.shape
    xn = jnp.transpose(x, (4, 0, 1, 2, 3)).reshape(T * B, C, H, W)
    xq = xn.astype(cast_dtype).astype(jnp.float32)
    wq = weight.astype(cast_dtype).astype(jnp.float32)
    y = lax.conv_general_dilated(
        xq, wq,
        window_strides=(stride, stride),
        padding=((padding, padding), (padding, padding)),
        dimension_numbers=("NCHW", "OIHW", "NCHW"),
        precision=lax.Precision.HIGHEST,
    ) + bias.astype(jnp.float32).reshape(1, -1, 1, 1)
    _, C_out, Ho, Wo = y.shape
    y = y.reshape(T, B, C_out, Ho, Wo)
    return jnp.transpose(y, (1, 2, 3, 4, 0))


# --------------------------------- main ------------------------------------ #
if __name__ == "__main__":
    B, C_in, H, W, T = 2, 4, 16, 16, 8
    C_out, KH, KW = 8, 3, 3
    stride, padding = 2, 1

    key = jax.random.PRNGKey(0)
    kx, kw_key, kb_key = jax.random.split(key, 3)

    x = jax.random.normal(kx, (B, C_in, H, W, T), dtype=jnp.float32)

    # Deterministic param init (PyTorch-Conv2d-like uniform bounds).
    fan_in = C_in * KH * KW
    bound = 1.0 / (fan_in ** 0.5)
    weight = jax.random.uniform(kw_key, (C_out, C_in, KH, KW),
                                minval=-bound, maxval=bound, dtype=jnp.float32)
    bias = jax.random.uniform(kb_key, (C_out,), minval=-bound, maxval=bound,
                              dtype=jnp.float32)

    fwd = jax.jit(functools.partial(tconv2d_forward, stride=stride,
                                    padding=padding))
    out = jax.block_until_ready(fwd(x, weight, bias))

    H_out = (H + 2 * padding - KH) // stride + 1
    W_out = (W + 2 * padding - KW) // stride + 1
    assert out.shape == (B, C_out, H_out, W_out, T)

    # The kernel quantizes GEMM operands to bf16 (f32 accumulation); compare
    # against a reference with matched operand rounding (tight tolerance) ...
    ref_bf16 = tconv2d_reference(x, weight, bias, stride=stride,
                                 padding=padding, cast_dtype=jnp.bfloat16)
    assert jnp.allclose(out, ref_bf16, atol=2e-3, rtol=2e-3), \
        float(jnp.max(jnp.abs(out - ref_bf16)))

    # ... and a loose sanity check against the pure-f32 reference.
    ref_f32 = tconv2d_reference(x, weight, bias, stride=stride, padding=padding)
    assert jnp.allclose(out, ref_f32, atol=5e-2, rtol=5e-2), \
        float(jnp.max(jnp.abs(out - ref_f32)))

    print("KERNEL_OK")
</pallas_src>

<mosaic_0001>
module attributes {stable_mosaic.version = 11 : i64} {
  func.func @_conv_gemm_kernel(%arg0: i32, %arg1: memref<8x36xbf16, #tpu.memory_space<vmem>>, %arg2: memref<36x1024xbf16, #tpu.memory_space<vmem>>, %arg3: memref<8x1xf32, #tpu.memory_space<vmem>>, %arg4: memref<8x1024xf32, #tpu.memory_space<vmem>>) attributes {dimension_semantics = [#tpu.dimension_semantics<parallel>], iteration_bounds = array<i64: 1>, scalar_prefetch = 0 : i64, scratch_operands = 0 : i64, tpu.core_type = #tpu.core_type<tc>, window_params = [{pipeline_mode = #tpu.pipeline_mode<synchronous>, transform_indices = @transform_0, window_bounds = array<i64: 8, 36>}, {transform_indices = @transform_1, window_bounds = array<i64: 36, 1024>}, {pipeline_mode = #tpu.pipeline_mode<synchronous>, transform_indices = @transform_2, window_bounds = array<i64: 8, 1>}, {transform_indices = @transform_3, window_bounds = array<i64: 8, 1024>}]} {
    %c0 = arith.constant 0 : index
    %c0_0 = arith.constant 0 : index
    %0 = vector.load %arg1[%c0, %c0_0] : memref<8x36xbf16, #tpu.memory_space<vmem>>, vector<8x36xbf16>
    %c0_1 = arith.constant 0 : index
    %c0_2 = arith.constant 0 : index
    %1 = vector.load %arg2[%c0_1, %c0_2] : memref<36x1024xbf16, #tpu.memory_space<vmem>>, vector<36x1024xbf16>
    %cst = arith.constant dense<0.000000e+00> : vector<8x1024xf32>
    %2 = tpu.matmul %0, %1, %cst {dimension_numbers = #tpu.dot_dimension_numbers<[1], [0], [0], [1], [0, 0, 1, 1], [], []>} : vector<8x36xbf16>, vector<36x1024xbf16>, vector<8x1024xf32> -> vector<8x1024xf32>
    %c0_3 = arith.constant 0 : index
    %c0_4 = arith.constant 0 : index
    %3 = vector.load %arg3[%c0_3, %c0_4] : memref<8x1xf32, #tpu.memory_space<vmem>>, vector<8x1xf32>
    %4 = vector.broadcast %3 : vector<8x1xf32> to vector<8x1024xf32>
    %5 = arith.addf %2, %4 : vector<8x1024xf32>
    %c0_5 = arith.constant 0 : index
    %c0_6 = arith.constant 0 : index
    %6 = vector.load %arg4[%c0_5, %c0_6] : memref<8x1024xf32, #tpu.memory_space<vmem>>, vector<8x1024xf32>
    tpu.vector_store %arg4[%c0_5, %c0_6], %5 {strides = array<i32>} : memref<8x1024xf32, #tpu.memory_space<vmem>>, vector<8x1024xf32>,
    return
  }
  func.func @transform_0(%arg0: i32) -> (i32, i32) {
    %c0_i32 = arith.constant 0 : i32
    %c0_i32_0 = arith.constant 0 : i32
    %c0_i32_1 = arith.constant 0 : i32
    return %c0_i32, %c0_i32_0 : i32, i32
  }
  func.func @transform_1(%arg0: i32) -> (i32, i32) {
    %c0_i32 = arith.constant 0 : i32
    %c0_i32_0 = arith.constant 0 : i32
    return %c0_i32, %arg0 : i32, i32
  }
  func.func @transform_2(%arg0: i32) -> (i32, i32) {
    %c0_i32 = arith.constant 0 : i32
    %c0_i32_0 = arith.constant 0 : i32
    %c0_i32_1 = arith.constant 0 : i32
    return %c0_i32, %c0_i32_0 : i32, i32
  }
  func.func @transform_3(%arg0: i32) -> (i32, i32) {
    %c0_i32 = arith.constant 0 : i32
    %c0_i32_0 = arith.constant 0 : i32
    return %c0_i32, %arg0 : i32, i32
  }
}

</mosaic_0001>

<llo_original>
// kernel: tconv2d_forward.1
$region0: #{tconv2d_forward.1}
  #allocation0 [shape = 'u32[]', space=smem, size = 0x4, offset = 0x4, fixed_abs, tag = 'smem constant byte address 0x4 - core index']
  #allocation1 [shape = 'u32[144,128]{1,0:T(1,128)}', space=vmem, size = 0x12000, scoped, tag = 'internal scratch']
  %s0 = inlined_call_operand.vmem [shape: bf16[8,36], index: 0, kind: input, shape index: {}]
  %s1 = inlined_call_operand.vmem [shape: bf16[36,1024], index: 1, kind: input, shape index: {}]
  %s2 = inlined_call_operand.vmem [shape: f32[8,1], index: 2, kind: input, shape index: {}]
  %s3 = inlined_call_operand.vmem [shape: f32[8,1024], index: 3, kind: output, shape index: {}]
  %s4 = sld [smem:[#allocation0]]
  $region22: #{tconv2d_forward.1} parent=0
    _
  %s6 = ssub.s32 1, %s4
  %s7 = scalar_select 0, %s6, %s4
  // Predicated region
  $region2: #{tconv2d_forward.1} parent=0 // pred_check
    _
  $region3: #{tconv2d_forward.1} parent=0 // pred_check_branch
    %9 = sbr.rel (0) target = $region5
  $region4: #{tconv2d_forward.1} parent=0 // pred_region
    _
  $region5: #{tconv2d_forward.1} parent=0 // pred_fallthru
    _
  // Predicated region
  $region6: #{tconv2d_forward.1} parent=0 // pred_check
    _
  $region7: #{tconv2d_forward.1} parent=0 // pred_check_branch
    %11 = sbr.rel (0) target = $region9
  $region8: #{tconv2d_forward.1} parent=0 // pred_region
    _
  $region9: #{tconv2d_forward.1} parent=0 // pred_fallthru
    _
  // Predicated region
  $region10: #{tconv2d_forward.1} parent=0 // pred_check
    _
  $region11: #{tconv2d_forward.1} parent=0 // pred_check_branch
    %13 = sbr.rel (0) target = $region13
  $region12: #{tconv2d_forward.1} parent=0 // pred_region
    _
  $region13: #{tconv2d_forward.1} parent=0 // pred_fallthru
    _
  %v15 = vld [vmem:[%s0] sm:$0xf]
  %v16 = vld [vmem:[%s1] sm:$0xff]
  %v17 = vld [vmem:[%s1 + $0x8] sm:$0xff]
  %v18 = vld [vmem:[%s1 + $0x10] sm:$0xff]
  %v19 = vld [vmem:[%s1 + $0x18] sm:$0xff]
  %v20 = vld [vmem:[%s1 + $0x20] sm:$0xff]
  %v21 = vld [vmem:[%s1 + $0x28] sm:$0xff]
  %v22 = vld [vmem:[%s1 + $0x30] sm:$0xff]
  %v23 = vld [vmem:[%s1 + $0x38] sm:$0xff]
  %v24 = vld [vmem:[%s1 + $0x40] sm:$0xff]
  %v25 = vld [vmem:[%s1 + $0x48] sm:$0xff]
  %v26 = vld [vmem:[%s1 + $0x50] sm:$0xff]
  %v27 = vld [vmem:[%s1 + $0x58] sm:$0xff]
  %v28 = vld [vmem:[%s1 + $0x60] sm:$0xff]
  %v29 = vld [vmem:[%s1 + $0x68] sm:$0xff]
  %v30 = vld [vmem:[%s1 + $0x70] sm:$0xff]
  %v31 = vld [vmem:[%s1 + $0x78] sm:$0xff]
  %v32 = vld [vmem:[%s1 + $0x80] sm:$0x33]
  %v33 = vld [vmem:[%s1 + $0x88] sm:$0x33]
  %v34 = vld [vmem:[%s1 + $0x90] sm:$0x33]
  %v35 = vld [vmem:[%s1 + $0x98] sm:$0x33]
  %v36 = vld [vmem:[%s2] sm:$0xff]
  %38 = vset.pattern.permute.xlu0 0
  %39 = vperm.xlu0 %38, %v36
  %v40 = vpop.permute.xlu0 %39
  %v62 = vunpack.c.l.b16 %v16
  %v63 = vunpack.c.h.b16 %v16
  %v64 = vunpack.c.l.b16 %v17
  %v65 = vunpack.c.h.b16 %v17
  %v66 = vunpack.c.l.b16 %v18
  %v67 = vunpack.c.h.b16 %v18
  %v68 = vunpack.c.l.b16 %v19
  %v69 = vunpack.c.h.b16 %v19
  %v70 = vunpack.c.l.b16 %v20
  %v71 = vunpack.c.h.b16 %v20
  %v72 = vunpack.c.l.b16 %v21
  %v73 = vunpack.c.h.b16 %v21
  %v74 = vunpack.c.l.b16 %v22
  %v75 = vunpack.c.h.b16 %v22
  %v76 = vunpack.c.l.b16 %v23
  %v77 = vunpack.c.h.b16 %v23
  %v78 = vunpack.c.l.b16 %v24
  %v79 = vunpack.c.h.b16 %v24
  %v80 = vunpack.c.l.b16 %v25
  %v81 = vunpack.c.h.b16 %v25
  %v82 = vunpack.c.l.b16 %v26
  %v83 = vunpack.c.h.b16 %v26
  %v84 = vunpack.c.l.b16 %v27
  %v85 = vunpack.c.h.b16 %v27
  %v86 = vunpack.c.l.b16 %v28
  %v87 = vunpack.c.h.b16 %v28
  %v88 = vunpack.c.l.b16 %v29
  %v89 = vunpack.c.h.b16 %v29
  %v90 = vunpack.c.l.b16 %v30
  %v91 = vunpack.c.h.b16 %v30
  %v92 = vunpack.c.l.b16 %v31
  %v93 = vunpack.c.h.b16 %v31
  %v94 = vunpack.c.l.b16 %v32
  %v95 = vunpack.c.h.b16 %v32
  %v96 = vunpack.c.l.b16 %v33
  %v97 = vunpack.c.h.b16 %v33
  %v98 = vunpack.c.l.b16 %v34
  %v99 = vunpack.c.h.b16 %v34
  %v100 = vunpack.c.l.b16 %v35
  %v101 = vunpack.c.h.b16 %v35
  %v102 = vpack.c.b16 %v70, %v62
  %v103 = vpack.c.b16 %v71, %v63
  %v104 = vpack.c.b16 %v72, %v64
  %v105 = vpack.c.b16 %v73, %v65
  %v106 = vpack.c.b16 %v74, %v66
  %v107 = vpack.c.b16 %v75, %v67
  %v108 = vpack.c.b16 %v76, %v68
  %v109 = vpack.c.b16 %v77, %v69
  %v110 = vpack.c.b16 %v86, %v78
  %v111 = vpack.c.b16 %v87, %v79
  %v112 = vpack.c.b16 %v88, %v80
  %v113 = vpack.c.b16 %v89, %v81
  %v114 = vpack.c.b16 %v90, %v82
  %v115 = vpack.c.b16 %v91, %v83
  %v116 = vpack.c.b16 %v92, %v84
  %v117 = vpack.c.b16 %v93, %v85
  %v118 = vpack.c.b16 %v94, %v94
  %v119 = vpack.c.b16 %v95, %v95
  %v120 = vpack.c.b16 %v96, %v96
  %v121 = vpack.c.b16 %v97, %v97
  %v122 = vpack.c.b16 %v98, %v98
  %v123 = vpack.c.b16 %v99, %v99
  %v124 = vpack.c.b16 %v100, %v100
  %v125 = vpack.c.b16 %v101, %v101
  %vm142 = vcmask 293888
  %v144 = vsel %vm142, %v15, 0
  %vm146 = vcmask 1041408
  %v148 = vsel %vm146, %v118, 0
  %v151 = vsel %vm146, %v119, 0
  %v154 = vsel %vm146, %v120, 0
  %v157 = vsel %vm146, %v121, 0
  %v160 = vsel %vm146, %v122, 0
  %v163 = vsel %vm146, %v123, 0
  %v166 = vsel %vm146, %v124, 0
  %v169 = vsel %vm146, %v125, 0
  %171 = vmatprep.subr.bf16.mxu0 %v103
  %172 = vmatpush1.bf16.msra.mxu0 %v102
  %173 = vmatprep.subr.bf16.mxu0 %v111
  %174 = vmatpush1.bf16.msra.mxu0 %v110
  %175 = vmatprep.subr.bf16.mxu0 %v151
  %176 = vmatpush1.bf16.msra.mxu0 %v148
  %177 = vmatprep.subr.bf16.mxu0 0
  %178 = vmatpush1.bf16.msra.mxu0 0
  %179 = vmatprep.subr.bf16.mxu0 0
  %180 = vmatpush1.bf16.msra.mxu0 0
  %181 = vmatprep.subr.bf16.mxu0 0
  %182 = vmatpush1.bf16.msra.mxu0 0
  %183 = vmatprep.subr.bf16.mxu0 0
  %184 = vmatpush1.bf16.msra.mxu0 0
  %185 = vmatprep.subr.bf16.mxu0 0
  %186 = vmatpush1.bf16.msra.mxu0 0
  %187 = vmatprep.subr.bf16.mxu0 0
  %188 = vmatpush1.bf16.msra.mxu0 0
  %189 = vmatprep.subr.bf16.mxu0 0
  %190 = vmatpush1.bf16.msra.mxu0 0
  %191 = vmatprep.subr.bf16.mxu0 0
  %192 = vmatpush1.bf16.msra.mxu0 0
  %193 = vmatprep.subr.bf16.mxu0 0
  %194 = vmatpush1.bf16.msra.mxu0 0
  %195 = vmatprep.subr.bf16.mxu0 0
  %196 = vmatpush1.bf16.msra.mxu0 0
  %197 = vmatprep.subr.bf16.mxu0 0
  %198 = vmatpush1.bf16.msra.mxu0 0
  %199 = vmatprep.subr.bf16.mxu0 0
  %200 = vmatpush1.bf16.msra.mxu0 0
  %201 = vmatprep.subr.bf16.mxu0 0
  %202 = vmatpush1.bf16.msra.mxu0 0
  %203 = vmatprep.mubr.bf16.mxu0 0
  %204 = vmatmul.mubr.bf16.gmra.mrb[0].mxu0 %v144
  %v205 = vpop.f32.mrb[0].mxu0
  %v206 = vadd.f32 %v40, %v205
  %v207 = vpop.f32.mrb[0].mxu0
  %v208 = vadd.f32 %v40, %v207
  %v209 = vpop.f32.mrb[0].mxu0
  %v210 = vpop.f32.mrb[0].mxu0
  %211 = vdwg.mxu0
  %212 = vmatprep.subr.bf16.mxu0 %v105
  %213 = vmatpush1.bf16.msra.mxu0 %v104
  %214 = vmatprep.subr.bf16.mxu0 %v113
  %215 = vmatpush1.bf16.msra.mxu0 %v112
  %216 = vmatprep.subr.bf16.mxu0 %v157
  %217 = vmatpush1.bf16.msra.mxu0 %v154
  %218 = vmatprep.subr.bf16.mxu0 0
  %219 = vmatpush1.bf16.msra.mxu0 0
  %220 = vmatprep.subr.bf16.mxu0 0
  %221 = vmatpush1.bf16.msra.mxu0 0
  %222 = vmatprep.subr.bf16.mxu0 0
  %223 = vmatpush1.bf16.msra.mxu0 0
  %224 = vmatprep.subr.bf16.mxu0 0
  %225 = vmatpush1.bf16.msra.mxu0 0
  %226 = vmatprep.subr.bf16.mxu0 0
  %227 = vmatpush1.bf16.msra.mxu0 0
  %228 = vmatprep.subr.bf16.mxu0 0
  %229 = vmatpush1.bf16.msra.mxu0 0
  %230 = vmatprep.subr.bf16.mxu0 0
  %231 = vmatpush1.bf16.msra.mxu0 0
  %232 = vmatprep.subr.bf16.mxu0 0
  %233 = vmatpush1.bf16.msra.mxu0 0
  %234 = vmatprep.subr.bf16.mxu0 0
  %235 = vmatpush1.bf16.msra.mxu0 0
  %236 = vmatprep.subr.bf16.mxu0 0
  %237 = vmatpush1.bf16.msra.mxu0 0
  %238 = vmatprep.subr.bf16.mxu0 0
  %239 = vmatpush1.bf16.msra.mxu0 0
  %240 = vmatprep.subr.bf16.mxu0 0
  %241 = vmatpush1.bf16.msra.mxu0 0
  %242 = vmatprep.subr.bf16.mxu0 0
  %243 = vmatpush1.bf16.msra.mxu0 0
  %244 = vmatprep.mubr.bf16.mxu0 0
  %245 = vmatmul.mubr.bf16.gmra.mrb[0].mxu0 %v144
  %v246 = vpop.f32.mrb[0].mxu0
  %v247 = vadd.f32 %v40, %v246
  %v248 = vpop.f32.mrb[0].mxu0
  %v249 = vadd.f32 %v40, %v248
  %v250 = vpop.f32.mrb[0].mxu0
  %v251 = vpop.f32.mrb[0].mxu0
  %252 = vdwg.mxu0
  %253 = vmatprep.subr.bf16.mxu0 %v107
  %254 = vmatpush1.bf16.msra.mxu0 %v106
  %255 = vmatprep.subr.bf16.mxu0 %v115
  %256 = vmatpush1.bf16.msra.mxu0 %v114
  %257 = vmatprep.subr.bf16.mxu0 %v163
  %258 = vmatpush1.bf16.msra.mxu0 %v160
  %259 = vmatprep.subr.bf16.mxu0 0
  %260 = vmatpush1.bf16.msra.mxu0 0
  %261 = vmatprep.subr.bf16.mxu0 0
  %262 = vmatpush1.bf16.msra.mxu0 0
  %263 = vmatprep.subr.bf16.mxu0 0
  %264 = vmatpush1.bf16.msra.mxu0 0
  %265 = vmatprep.subr.bf16.mxu0 0
  %266 = vmatpush1.bf16.msra.mxu0 0
  %267 = vmatprep.subr.bf16.mxu0 0
  %268 = vmatpush1.bf16.msra.mxu0 0
  %269 = vmatprep.subr.bf16.mxu0 0
  %270 = vmatpush1.bf16.msra.mxu0 0
  %271 = vmatprep.subr.bf16.mxu0 0
  %272 = vmatpush1.bf16.msra.mxu0 0
  %273 = vmatprep.subr.bf16.mxu0 0
  %274 = vmatpush1.bf16.msra.mxu0 0
  %275 = vmatprep.subr.bf16.mxu0 0
  %276 = vmatpush1.bf16.msra.mxu0 0
  %277 = vmatprep.subr.bf16.mxu0 0
  %278 = vmatpush1.bf16.msra.mxu0 0
  %279 = vmatprep.subr.bf16.mxu0 0
  %280 = vmatpush1.bf16.msra.mxu0 0
  %281 = vmatprep.subr.bf16.mxu0 0
  %282 = vmatpush1.bf16.msra.mxu0 0
  %283 = vmatprep.subr.bf16.mxu0 0
  %284 = vmatpush1.bf16.msra.mxu0 0
  %285 = vmatprep.mubr.bf16.mxu0 0
  %286 = vmatmul.mubr.bf16.gmra.mrb[0].mxu0 %v144
  %v287 = vpop.f32.mrb[0].mxu0
  %v288 = vadd.f32 %v40, %v287
  %v289 = vpop.f32.mrb[0].mxu0
  %v290 = vadd.f32 %v40, %v289
  %v291 = vpop.f32.mrb[0].mxu0
  %v292 = vpop.f32.mrb[0].mxu0
  %293 = vdwg.mxu0
  %294 = vmatprep.subr.bf16.mxu0 %v109
  %295 = vmatpush1.bf16.msra.mxu0 %v108
  %296 = vmatprep.subr.bf16.mxu0 %v117
  %297 = vmatpush1.bf16.msra.mxu0 %v116
  %298 = vmatprep.subr.bf16.mxu0 %v169
  %299 = vmatpush1.bf16.msra.mxu0 %v166
  %300 = vmatprep.subr.bf16.mxu0 0
  %301 = vmatpush1.bf16.msra.mxu0 0
  %302 = vmatprep.subr.bf16.mxu0 0
  %303 = vmatpush1.bf16.msra.mxu0 0
  %304 = vmatprep.subr.bf16.mxu0 0
  %305 = vmatpush1.bf16.msra.mxu0 0
  %306 = vmatprep.subr.bf16.mxu0 0
  %307 = vmatpush1.bf16.msra.mxu0 0
  %308 = vmatprep.subr.bf16.mxu0 0
  %309 = vmatpush1.bf16.msra.mxu0 0
  %310 = vmatprep.subr.bf16.mxu0 0
  %311 = vmatpush1.bf16.msra.mxu0 0
  %312 = vmatprep.subr.bf16.mxu0 0
  %313 = vmatpush1.bf16.msra.mxu0 0
  %314 = vmatprep.subr.bf16.mxu0 0
  %315 = vmatpush1.bf16.msra.mxu0 0
  %316 = vmatprep.subr.bf16.mxu0 0
  %317 = vmatpush1.bf16.msra.mxu0 0
  %318 = vmatprep.subr.bf16.mxu0 0
  %319 = vmatpush1.bf16.msra.mxu0 0
  %320 = vmatprep.subr.bf16.mxu0 0
  %321 = vmatpush1.bf16.msra.mxu0 0
  %322 = vmatprep.subr.bf16.mxu0 0
  %323 = vmatpush1.bf16.msra.mxu0 0
  %324 = vmatprep.subr.bf16.mxu0 0
  %325 = vmatpush1.bf16.msra.mxu0 0
  %326 = vmatprep.mubr.bf16.mxu0 0
  %327 = vmatmul.mubr.bf16.gmra.mrb[0].mxu0 %v144
  %v328 = vpop.f32.mrb[0].mxu0
  %v329 = vadd.f32 %v40, %v328
  %v330 = vpop.f32.mrb[0].mxu0
  %v331 = vadd.f32 %v40, %v330
  %v332 = vpop.f32.mrb[0].mxu0
  %v333 = vpop.f32.mrb[0].mxu0
  %334 = vdwg.mxu0
  %335 = vst [vmem:[%s3] sm:$0xff] %v206
  %336 = vst [vmem:[%s3 + $0x8] sm:$0xff] %v208
  %337 = vst [vmem:[%s3 + $0x10] sm:$0xff] %v247
  %338 = vst [vmem:[%s3 + $0x18] sm:$0xff] %v249
  %339 = vst [vmem:[%s3 + $0x20] sm:$0xff] %v288
  %340 = vst [vmem:[%s3 + $0x28] sm:$0xff] %v290
  %341 = vst [vmem:[%s3 + $0x30] sm:$0xff] %v329
  %342 = vst [vmem:[%s3 + $0x38] sm:$0xff] %v331
  // Predicated region
  $region14: #{tconv2d_forward.1} parent=0 // pred_check
    _
  $region15: #{tconv2d_forward.1} parent=0 // pred_check_branch
    %344 = sbr.rel (0) target = $region17
  $region16: #{tconv2d_forward.1} parent=0 // pred_region
    _
  $region17: #{tconv2d_forward.1} parent=0 // pred_fallthru
    _
  // Predicated region
  $region18: #{tconv2d_forward.1} parent=0 // pred_check
    _
  $region19: #{tconv2d_forward.1} parent=0 // pred_check_branch
    %346 = sbr.rel (0) target = $region21
  $region20: #{tconv2d_forward.1} parent=0 // pred_region
    _
  $region21: #{tconv2d_forward.1} parent=0 // pred_fallthru
    _

</llo_original>
